<compile_context>
chip_gen: v7x
topology: tpu7x:2x2x1
jax: 0.10.0
libtpu: 0.0.40
codegen_flags: <defaults>
</compile_context>

<pallas_src>
import functools

import jax
import jax.numpy as jnp
from jax.experimental import pallas as pl
from jax.experimental.pallas import tpu as pltpu

# ----------------------------------------------------------------------------
# Problem sizes / synthetic RNNSTSPConfig constants (Masse et al. STSP setup)
# ----------------------------------------------------------------------------
INPUT_SIZE = 16
HIDDEN_SIZE = 32
BATCH = 8
SEQ = 8
H_PAD = 128                       # lane-dense padded hidden size

DT = 10.0                         # ms
DT_SEC = DT / 1000.0              # syncfg.dt_sec
TAU_MEMBRANE = 100.0              # ms
ALPHA_NEURON = DT / TAU_MEMBRANE  # syncfg.alpha_neuron
EXC_FRAC = 0.8                    # excitatory / inhibitory split (EI = True)


def make_config(key):
    """Build RNNSTSPCell parameters/buffers + packed/padded kernel constants."""
    k_in, k_rnn = jax.random.split(key, 2)
    n_exc = int(EXC_FRAC * HIDDEN_SIZE)

    w_in0 = jax.random.uniform(k_in, (INPUT_SIZE, HIDDEN_SIZE),
                               jnp.float32, 0.0, 0.2)
    w_rnn0 = jax.random.uniform(k_rnn, (HIDDEN_SIZE, HIDDEN_SIZE),
                                jnp.float32, 0.0, 0.2)
    b_rnn0 = jnp.zeros((1, HIDDEN_SIZE), jnp.float32)

    # Dale's law: +1 excitatory rows, -1 inhibitory rows.
    ei_sign = jnp.where(jnp.arange(HIDDEN_SIZE) < n_exc, 1.0, -1.0).astype(jnp.float32)
    ei_matrix = jnp.diag(ei_sign)
    w_rnn_mask = 1.0 - jnp.eye(HIDDEN_SIZE, dtype=jnp.float32)   # no self-connections

    # Alternating facilitating / depressing synapses.
    idx = jnp.arange(HIDDEN_SIZE)
    facil = (idx % 2 == 0)
    alpha_stf = jnp.where(facil, DT / 1500.0, DT / 200.0).astype(jnp.float32)[None, :]
    alpha_std = jnp.where(facil, DT / 200.0, DT / 1500.0).astype(jnp.float32)[None, :]
    U = jnp.where(facil, 0.15, 0.45).astype(jnp.float32)[None, :]
    dynamic_synapse = jnp.ones((1, HIDDEN_SIZE), jnp.float32)

    h0 = jnp.full((1, HIDDEN_SIZE), 0.1, jnp.float32)
    syn_x_init = jnp.ones((1, HIDDEN_SIZE), jnp.float32)
    syn_u_init = U

    cfg = dict(w_in0=w_in0, w_rnn0=w_rnn0, b_rnn0=b_rnn0,
               ei_matrix=ei_matrix, w_rnn_mask=w_rnn_mask,
               alpha_stf=alpha_stf, alpha_std=alpha_std, U=U,
               dynamic_synapse=dynamic_synapse,
               h0=h0, syn_x_init=syn_x_init, syn_u_init=syn_u_init)

    # ---- kernel-side packed / padded constants (built once at model load) ----
    pad_h = H_PAD - HIDDEN_SIZE

    # relu(W_in), pre-folded; padded columns are zero.
    w_in_relu_p = jnp.pad(jnp.maximum(w_in0, 0.0), ((0, 0), (0, pad_h)))   # (I, H_PAD)

    # Effective recurrent weight, fully pre-folded:
    #   w_rnn_mask * (EI_matrix @ relu(W_hh)) == (w_rnn_mask * ei_sign[:, None]) * relu(W_hh)
    w_rnn_eff = (w_rnn_mask * ei_sign[:, None]) * jnp.maximum(w_rnn0, 0.0)
    w_rnn_eff_p = jnp.pad(w_rnn_eff, ((0, pad_h), (0, pad_h)))             # (H_PAD, H_PAD)

    dyn = dynamic_synapse
    rows = [
        alpha_std * dyn,         # row 0: c_std
        DT_SEC * dyn,            # row 1: c_dt
        alpha_stf * U * dyn,     # row 2: c_stf_u
        alpha_stf * dyn,         # row 3: c_stf
        DT_SEC * U * dyn,        # row 4: c_dt_u
        b_rnn0,                  # row 5: bias
        jnp.zeros_like(b_rnn0),  # pad rows to a full (8, 128) sublane tile
        jnp.zeros_like(b_rnn0),
    ]
    params = jnp.concatenate(rows, axis=0)                   # (8, HIDDEN_SIZE)
    params_p = jnp.pad(params, ((0, 0), (0, pad_h)))         # (8, H_PAD)

    cfg.update(w_in_relu_p=w_in_relu_p, w_rnn_eff_p=w_rnn_eff_p, params_p=params_p)
    return cfg


# ----------------------------------------------------------------------------
# Pallas kernel: single grid step, T recurrent steps in an unrolled fori_loop
# ----------------------------------------------------------------------------
def rnnstsp_seq_kernel(inp_ref, w_in_ref, w_rnn_ref, params_ref, init_ref,
                       h_seq_ref, sx_out_ref, su_out_ref,
                       xproj_ref,
                       *, alpha_neuron, T, B):
    # --- Hoisted, state-independent work (runs once per call) ----------------
    p = params_ref[...]
    bias = p[5:6, :]

    # Input projection + bias for the whole sequence: one batched MXU matmul.
    xproj_ref[...] = (
        jnp.dot(inp_ref[...], w_in_ref[...], preferred_element_type=jnp.float32)
        + bias)

    # Pre-broadcast per-neuron constants over the batch ONCE (outside the loop).
    c_std = jnp.broadcast_to(p[0:1, :], (B, H_PAD))     # alpha_std * dyn
    c_dt = jnp.broadcast_to(p[1:2, :], (B, H_PAD))      # dt_sec * dyn
    c_stf_u = jnp.broadcast_to(p[2:3, :], (B, H_PAD))   # alpha_stf * U * dyn
    c_stf = jnp.broadcast_to(p[3:4, :], (B, H_PAD))     # alpha_stf * dyn
    c_dt_u = jnp.broadcast_to(p[4:5, :], (B, H_PAD))    # dt_sec * U * dyn

    w_rnn = w_rnn_ref[...]                               # pre-folded mask*EI*relu(W_hh)

    h0 = init_ref[0]
    sx0 = init_ref[1]
    su0 = init_ref[2]

    # --- Recurrence: pure vreg FMAs + one MXU matmul per step -----------------
    def step(t, carry):
        h, syn_x, syn_u = carry

        # Short-term synaptic plasticity dynamics (elementwise, VPU, f32).
        syn_x_new = jnp.clip(
            syn_x + c_std * (1.0 - syn_x) - c_dt * syn_u * syn_x * h, 0.0, 1.0)
        syn_u_new = jnp.clip(
            syn_u + c_stf_u - c_stf * syn_u + c_dt_u * (1.0 - syn_u) * h, 0.0, 1.0)
        h_post = syn_u_new * syn_x_new * h

        # Precomputed x_proj slice for this step (sublane-aligned: B == 8).
        off = pl.multiple_of(t * B, B)
        x_t = xproj_ref[pl.ds(off, B), :]

        pre = x_t + jnp.dot(h_post, w_rnn, preferred_element_type=jnp.float32)
        h_new = h * (1.0 - alpha_neuron) + alpha_neuron * jnp.maximum(pre, 0.0)

        # Lane-dense (8, 128) store into the resident h_seq block.
        h_seq_ref[t] = h_new
        return h_new, syn_x_new, syn_u_new

    _, sx_f, su_f = jax.lax.fori_loop(0, T, step, (h0, sx0, su0), unroll=True)

    # Final synaptic state written unconditionally after the loop.
    sx_out_ref[...] = sx_f
    su_out_ref[...] = su_f


def rnnstsp_forward_seq(inp_seq, hidden_in, cfg):
    """Run T RNNSTSPCell steps in one fused Pallas call (single grid step).

    inp_seq: (T, B, INPUT_SIZE); hidden_in: tuple of (B, HIDDEN_SIZE) states.
    Returns padded (h_seq (T, B, H_PAD), syn_x_final (B, H_PAD),
    syn_u_final (B, H_PAD)); valid lanes are [:HIDDEN_SIZE].
    """
    T, B, I = inp_seq.shape
    pad_h = H_PAD - HIDDEN_SIZE
    h0, sx0, su0 = hidden_in
    init_state = jnp.stack(
        [jnp.pad(h0, ((0, 0), (0, pad_h))),
         jnp.pad(sx0, ((0, 0), (0, pad_h))),
         jnp.pad(su0, ((0, 0), (0, pad_h)))], axis=0)        # (3, B, H_PAD)
    inp_flat = inp_seq.reshape(T * B, I)                     # one batched LHS

    kernel = functools.partial(rnnstsp_seq_kernel,
                               alpha_neuron=ALPHA_NEURON, T=T, B=B)

    h_seq, sx_f, su_f = pl.pallas_call(
        kernel,
        out_shape=(jax.ShapeDtypeStruct((T, B, H_PAD), jnp.float32),
                   jax.ShapeDtypeStruct((B, H_PAD), jnp.float32),
                   jax.ShapeDtypeStruct((B, H_PAD), jnp.float32)),
        grid=(1,),
        in_specs=[
            pl.BlockSpec((T * B, I), lambda i: (0, 0)),        # flattened input
            pl.BlockSpec((I, H_PAD), lambda i: (0, 0)),        # relu(W_in)
            pl.BlockSpec((H_PAD, H_PAD), lambda i: (0, 0)),    # pre-folded W_rnn
            pl.BlockSpec((8, H_PAD), lambda i: (0, 0)),        # packed consts
            pl.BlockSpec((3, B, H_PAD), lambda i: (0, 0, 0)),  # init state
        ],
        out_specs=(
            pl.BlockSpec((T, B, H_PAD), lambda i: (0, 0, 0)),  # h per step (resident)
            pl.BlockSpec((B, H_PAD), lambda i: (0, 0)),        # syn_x final
            pl.BlockSpec((B, H_PAD), lambda i: (0, 0)),        # syn_u final
        ),
        scratch_shapes=[
            pltpu.VMEM((T * B, H_PAD), jnp.float32),           # x_proj (+bias)
        ],
        compiler_params=pltpu.CompilerParams(
            dimension_semantics=("arbitrary",)),
    )(inp_flat, cfg["w_in_relu_p"], cfg["w_rnn_eff_p"], cfg["params_p"],
      init_state)

    return h_seq, sx_f, su_f


# ----------------------------------------------------------------------------
# Pure-JAX reference (mirrors the PyTorch forward exactly, one step)
# ----------------------------------------------------------------------------
def rnnstsp_reference_step(inp, hidden_in, cfg):
    h_in, syn_x, syn_u = hidden_in
    hp = jax.lax.Precision.HIGHEST
    syn_x = syn_x + (cfg["alpha_std"] * (1.0 - syn_x)
                     - DT_SEC * syn_u * syn_x * h_in) * cfg["dynamic_synapse"]
    syn_u = syn_u + (cfg["alpha_stf"] * (cfg["U"] - syn_u)
                     + DT_SEC * cfg["U"] * (1.0 - syn_u) * h_in) * cfg["dynamic_synapse"]
    syn_x = jnp.clip(syn_x, 0.0, 1.0)
    syn_u = jnp.clip(syn_u, 0.0, 1.0)
    h_post = syn_u * syn_x * h_in
    eff_rnn_w = cfg["w_rnn_mask"] * jnp.matmul(
        cfg["ei_matrix"], jnp.maximum(cfg["w_rnn0"], 0.0), precision=hp)
    pre = (jnp.matmul(inp, jnp.maximum(cfg["w_in0"], 0.0), precision=hp)
           + jnp.matmul(h_post, eff_rnn_w, precision=hp)
           + cfg["b_rnn0"])
    h_out = h_in * (1.0 - ALPHA_NEURON) + ALPHA_NEURON * jnp.maximum(pre, 0.0)
    return h_out, syn_x, syn_u


if __name__ == "__main__":
    key = jax.random.PRNGKey(0)
    k_cfg, k_inp = jax.random.split(key)

    cfg = make_config(k_cfg)

    # init_hidden(BATCH): repeat config init rows over the batch.
    h0 = jnp.tile(cfg["h0"], (BATCH, 1))
    sx0 = jnp.tile(cfg["syn_x_init"], (BATCH, 1))
    su0 = jnp.tile(cfg["syn_u_init"], (BATCH, 1))

    inp_seq = jax.random.uniform(k_inp, (SEQ, BATCH, INPUT_SIZE),
                                 jnp.float32, 0.0, 1.0)

    # ---- single-step (T = 1): matches the module's forward() -----------------
    h1, sx1, su1 = rnnstsp_forward_seq(inp_seq[:1], (h0, sx0, su0), cfg)
    jax.block_until_ready((h1, sx1, su1))
    h1_r, sx1_r, su1_r = rnnstsp_reference_step(inp_seq[0], (h0, sx0, su0), cfg)
    assert h1.shape == (1, BATCH, H_PAD)
    # Slices below are test-only (the padded lane-dense layout is the kernel API).
    assert jnp.allclose(h1[0, :, :HIDDEN_SIZE], h1_r, atol=2e-3, rtol=2e-3)
    assert jnp.allclose(sx1[:, :HIDDEN_SIZE], sx1_r, atol=1e-3, rtol=1e-3)
    assert jnp.allclose(su1[:, :HIDDEN_SIZE], su1_r, atol=1e-3, rtol=1e-3)
    # Padded lanes must stay exactly zero.
    assert jnp.all(h1[0, :, HIDDEN_SIZE:] == 0.0)

    # ---- fused sequence (T = SEQ) --------------------------------------------
    h_seq, sx_f, su_f = rnnstsp_forward_seq(inp_seq, (h0, sx0, su0), cfg)
    jax.block_until_ready((h_seq, sx_f, su_f))

    hidden = (h0, sx0, su0)
    ref_hs = []
    for t in range(SEQ):
        hidden = rnnstsp_reference_step(inp_seq[t], hidden, cfg)
        ref_hs.append(hidden[0])
    h_ref_seq = jnp.stack(ref_hs, axis=0)

    assert h_seq.shape == (SEQ, BATCH, H_PAD)
    assert jnp.allclose(h_seq[:, :, :HIDDEN_SIZE], h_ref_seq, atol=2e-3, rtol=2e-3)
    assert jnp.allclose(sx_f[:, :HIDDEN_SIZE], hidden[1], atol=1e-3, rtol=1e-3)
    assert jnp.allclose(su_f[:, :HIDDEN_SIZE], hidden[2], atol=1e-3, rtol=1e-3)
    assert jnp.all(h_seq[:, :, HIDDEN_SIZE:] == 0.0)

    print("KERNEL_OK")
</pallas_src>

<mosaic_0001>
module attributes {stable_mosaic.version = 11 : i64} {
  func.func @rnnstsp_seq_kernel(%arg0: i32, %arg1: memref<8x16xf32, #tpu.memory_space<vmem>>, %arg2: memref<16x128xf32, #tpu.memory_space<vmem>>, %arg3: memref<128x128xf32, #tpu.memory_space<vmem>>, %arg4: memref<8x128xf32, #tpu.memory_space<vmem>>, %arg5: memref<3x8x128xf32, #tpu.memory_space<vmem>>, %arg6: memref<1x8x128xf32, #tpu.memory_space<vmem>>, %arg7: memref<8x128xf32, #tpu.memory_space<vmem>>, %arg8: memref<8x128xf32, #tpu.memory_space<vmem>>, %arg9: memref<8x128xf32, #tpu.memory_space<vmem>>) attributes {dimension_semantics = [#tpu.dimension_semantics<arbitrary>], iteration_bounds = array<i64: 1>, scalar_prefetch = 0 : i64, scratch_operands = 1 : i64, tpu.core_type = #tpu.core_type<tc>, window_params = [{pipeline_mode = #tpu.pipeline_mode<synchronous>, transform_indices = @transform_0, window_bounds = array<i64: 8, 16>}, {pipeline_mode = #tpu.pipeline_mode<synchronous>, transform_indices = @transform_1, window_bounds = array<i64: 16, 128>}, {pipeline_mode = #tpu.pipeline_mode<synchronous>, transform_indices = @transform_2, window_bounds = array<i64: 128, 128>}, {pipeline_mode = #tpu.pipeline_mode<synchronous>, transform_indices = @transform_3, window_bounds = array<i64: 8, 128>}, {pipeline_mode = #tpu.pipeline_mode<synchronous>, transform_indices = @transform_4, window_bounds = array<i64: 3, 8, 128>}, {pipeline_mode = #tpu.pipeline_mode<synchronous>, transform_indices = @transform_5, window_bounds = array<i64: 1, 8, 128>}, {pipeline_mode = #tpu.pipeline_mode<synchronous>, transform_indices = @transform_6, window_bounds = array<i64: 8, 128>}, {pipeline_mode = #tpu.pipeline_mode<synchronous>, transform_indices = @transform_7, window_bounds = array<i64: 8, 128>}]} {
    %c0 = arith.constant 0 : index
    %c0_0 = arith.constant 0 : index
    %0 = vector.load %arg4[%c0, %c0_0] : memref<8x128xf32, #tpu.memory_space<vmem>>, vector<8x128xf32>
    %1 = vector.extract_strided_slice %0 {offsets = [5, 0], sizes = [1, 128], strides = [1, 1]} : vector<8x128xf32> to vector<1x128xf32>
    %c0_1 = arith.constant 0 : index
    %c0_2 = arith.constant 0 : index
    %2 = vector.load %arg1[%c0_1, %c0_2] : memref<8x16xf32, #tpu.memory_space<vmem>>, vector<8x16xf32>
    %c0_3 = arith.constant 0 : index
    %c0_4 = arith.constant 0 : index
    %3 = vector.load %arg2[%c0_3, %c0_4] : memref<16x128xf32, #tpu.memory_space<vmem>>, vector<16x128xf32>
    %cst = arith.constant dense<0.000000e+00> : vector<8x128xf32>
    %4 = tpu.matmul %2, %3, %cst {dimension_numbers = #tpu.dot_dimension_numbers<[1], [0], [0], [1], [0, 0, 1, 1], [], []>} : vector<8x16xf32>, vector<16x128xf32>, vector<8x128xf32> -> vector<8x128xf32>
    %5 = vector.broadcast %1 : vector<1x128xf32> to vector<8x128xf32>
    %6 = arith.addf %4, %5 : vector<8x128xf32>
    %c0_5 = arith.constant 0 : index
    %c0_6 = arith.constant 0 : index
    %7 = vector.load %arg9[%c0_5, %c0_6] : memref<8x128xf32, #tpu.memory_space<vmem>>, vector<8x128xf32>
    tpu.vector_store %arg9[%c0_5, %c0_6], %6 {strides = array<i32>} : memref<8x128xf32, #tpu.memory_space<vmem>>, vector<8x128xf32>,
    %8 = vector.extract_strided_slice %0 {offsets = [0, 0], sizes = [1, 128], strides = [1, 1]} : vector<8x128xf32> to vector<1x128xf32>
    %9 = vector.shape_cast %8 : vector<1x128xf32> to vector<1x128xf32>
    %10 = vector.broadcast %9 : vector<1x128xf32> to vector<8x128xf32>
    %11 = vector.extract_strided_slice %0 {offsets = [1, 0], sizes = [1, 128], strides = [1, 1]} : vector<8x128xf32> to vector<1x128xf32>
    %12 = vector.shape_cast %11 : vector<1x128xf32> to vector<1x128xf32>
    %13 = vector.broadcast %12 : vector<1x128xf32> to vector<8x128xf32>
    %14 = vector.extract_strided_slice %0 {offsets = [2, 0], sizes = [1, 128], strides = [1, 1]} : vector<8x128xf32> to vector<1x128xf32>
    %15 = vector.shape_cast %14 : vector<1x128xf32> to vector<1x128xf32>
    %16 = vector.broadcast %15 : vector<1x128xf32> to vector<8x128xf32>
    %17 = vector.extract_strided_slice %0 {offsets = [3, 0], sizes = [1, 128], strides = [1, 1]} : vector<8x128xf32> to vector<1x128xf32>
    %18 = vector.shape_cast %17 : vector<1x128xf32> to vector<1x128xf32>
    %19 = vector.broadcast %18 : vector<1x128xf32> to vector<8x128xf32>
    %20 = vector.extract_strided_slice %0 {offsets = [4, 0], sizes = [1, 128], strides = [1, 1]} : vector<8x128xf32> to vector<1x128xf32>
    %21 = vector.shape_cast %20 : vector<1x128xf32> to vector<1x128xf32>
    %22 = vector.broadcast %21 : vector<1x128xf32> to vector<8x128xf32>
    %c0_7 = arith.constant 0 : index
    %c0_8 = arith.constant 0 : index
    %23 = vector.load %arg3[%c0_7, %c0_8] : memref<128x128xf32, #tpu.memory_space<vmem>>, vector<128x128xf32>
    %c0_9 = arith.constant 0 : index
    %c0_10 = arith.constant 0 : index
    %c0_11 = arith.constant 0 : index
    %24 = vector.load %arg5[%c0_9, %c0_10, %c0_11] : memref<3x8x128xf32, #tpu.memory_space<vmem>>, vector<1x8x128xf32>
    %25 = vector.shape_cast %24 : vector<1x8x128xf32> to vector<8x128xf32>
    %c1 = arith.constant 1 : index
    %c0_12 = arith.constant 0 : index
    %c0_13 = arith.constant 0 : index
    %26 = vector.load %arg5[%c1, %c0_12, %c0_13] : memref<3x8x128xf32, #tpu.memory_space<vmem>>, vector<1x8x128xf32>
    %27 = vector.shape_cast %26 : vector<1x8x128xf32> to vector<8x128xf32>
    %c2 = arith.constant 2 : index
    %c0_14 = arith.constant 0 : index
    %c0_15 = arith.constant 0 : index
    %28 = vector.load %arg5[%c2, %c0_14, %c0_15] : memref<3x8x128xf32, #tpu.memory_space<vmem>>, vector<1x8x128xf32>
    %29 = vector.shape_cast %28 : vector<1x8x128xf32> to vector<8x128xf32>
    %c0_i32 = arith.constant 0 : i32
    %cst_16 = arith.constant 1.000000e+00 : f32
    %30 = vector.broadcast %cst_16 : f32 to vector<8x128xf32>
    %31 = arith.subf %30, %27 : vector<8x128xf32>
    %32 = arith.mulf %10, %31 : vector<8x128xf32>
    %33 = arith.addf %27, %32 : vector<8x128xf32>
    %34 = arith.mulf %13, %29 : vector<8x128xf32>
    %35 = arith.mulf %34, %27 : vector<8x128xf32>
    %36 = arith.mulf %35, %25 : vector<8x128xf32>
    %37 = arith.subf %33, %36 : vector<8x128xf32>
    %cst_17 = arith.constant 0.000000e+00 : f32
    %cst_18 = arith.constant 1.000000e+00 : f32
    %38 = vector.broadcast %cst_17 : f32 to vector<8x128xf32>
    %39 = arith.maximumf %38, %37 : vector<8x128xf32>
    %40 = vector.broadcast %cst_18 : f32 to vector<8x128xf32>
    %41 = arith.minimumf %40, %39 : vector<8x128xf32>
    %42 = arith.addf %29, %16 : vector<8x128xf32>
    %43 = arith.mulf %19, %29 : vector<8x128xf32>
    %44 = arith.subf %42, %43 : vector<8x128xf32>
    %cst_19 = arith.constant 1.000000e+00 : f32
    %45 = vector.broadcast %cst_19 : f32 to vector<8x128xf32>
    %46 = arith.subf %45, %29 : vector<8x128xf32>
    %47 = arith.mulf %22, %46 : vector<8x128xf32>
    %48 = arith.mulf %47, %25 : vector<8x128xf32>
    %49 = arith.addf %44, %48 : vector<8x128xf32>
    %cst_20 = arith.constant 0.000000e+00 : f32
    %cst_21 = arith.constant 1.000000e+00 : f32
    %50 = vector.broadcast %cst_20 : f32 to vector<8x128xf32>
    %51 = arith.maximumf %50, %49 : vector<8x128xf32>
    %52 = vector.broadcast %cst_21 : f32 to vector<8x128xf32>
    %53 = arith.minimumf %52, %51 : vector<8x128xf32>
    %54 = arith.mulf %53, %41 : vector<8x128xf32>
    %55 = arith.mulf %54, %25 : vector<8x128xf32>
    %c8_i32 = arith.constant 8 : i32
    %56 = arith.muli %c0_i32, %c8_i32 : i32
    %57 = tpu.assume_multiple %56, 8 : i32
    %58 = arith.index_cast %57 : i32 to index
    %c0_22 = arith.constant 0 : index
    %59 = vector.load %arg9[%58, %c0_22] : memref<8x128xf32, #tpu.memory_space<vmem>>, vector<8x128xf32>
    %cst_23 = arith.constant dense<0.000000e+00> : vector<8x128xf32>
    %60 = tpu.matmul %55, %23, %cst_23 {dimension_numbers = #tpu.dot_dimension_numbers<[1], [0], [0], [1], [0, 0, 1, 1], [], []>} : vector<8x128xf32>, vector<128x128xf32>, vector<8x128xf32> -> vector<8x128xf32>
    %61 = arith.addf %59, %60 : vector<8x128xf32>
    %cst_24 = arith.constant 0.899999976 : f32
    %62 = vector.broadcast %cst_24 : f32 to vector<8x128xf32>
    %63 = arith.mulf %25, %62 : vector<8x128xf32>
    %cst_25 = arith.constant 0.000000e+00 : f32
    %64 = vector.broadcast %cst_25 : f32 to vector<8x128xf32>
    %65 = arith.maximumf %61, %64 : vector<8x128xf32>
    %cst_26 = arith.constant 1.000000e-01 : f32
    %66 = vector.broadcast %cst_26 : f32 to vector<8x128xf32>
    %67 = arith.mulf %66, %65 : vector<8x128xf32>
    %68 = arith.addf %63, %67 : vector<8x128xf32>
    %69 = arith.index_cast %c0_i32 : i32 to index
    %c0_27 = arith.constant 0 : index
    %c0_28 = arith.constant 0 : index
    %70 = vector.load %arg6[%69, %c0_27, %c0_28] : memref<1x8x128xf32, #tpu.memory_space<vmem>>, vector<1x8x128xf32>
    %71 = vector.shape_cast %70 : vector<1x8x128xf32> to vector<8x128xf32>
    %72 = vector.shape_cast %68 : vector<8x128xf32> to vector<1x8x128xf32>
    tpu.vector_store %arg6[%69, %c0_27, %c0_28], %72 {strides = array<i32>} : memref<1x8x128xf32, #tpu.memory_space<vmem>>, vector<1x8x128xf32>,
    %c1_i32 = arith.constant 1 : i32
    %c0_29 = arith.constant 0 : index
    %c0_30 = arith.constant 0 : index
    %73 = vector.load %arg7[%c0_29, %c0_30] : memref<8x128xf32, #tpu.memory_space<vmem>>, vector<8x128xf32>
    tpu.vector_store %arg7[%c0_29, %c0_30], %41 {strides = array<i32>} : memref<8x128xf32, #tpu.memory_space<vmem>>, vector<8x128xf32>,
    %c0_31 = arith.constant 0 : index
    %c0_32 = arith.constant 0 : index
    %74 = vector.load %arg8[%c0_31, %c0_32] : memref<8x128xf32, #tpu.memory_space<vmem>>, vector<8x128xf32>
    tpu.vector_store %arg8[%c0_31, %c0_32], %53 {strides = array<i32>} : memref<8x128xf32, #tpu.memory_space<vmem>>, vector<8x128xf32>,
    return
  }
  func.func @transform_0(%arg0: i32) -> (i32, i32) {
    %c0_i32 = arith.constant 0 : i32
    %c0_i32_0 = arith.constant 0 : i32
    %c0_i32_1 = arith.constant 0 : i32
    return %c0_i32, %c0_i32_0 : i32, i32
  }
  func.func @transform_1(%arg0: i32) -> (i32, i32) {
    %c0_i32 = arith.constant 0 : i32
    %c0_i32_0 = arith.constant 0 : i32
    %c0_i32_1 = arith.constant 0 : i32
    return %c0_i32, %c0_i32_0 : i32, i32
  }
  func.func @transform_2(%arg0: i32) -> (i32, i32) {
    %c0_i32 = arith.constant 0 : i32
    %c0_i32_0 = arith.constant 0 : i32
    %c0_i32_1 = arith.constant 0 : i32
    return %c0_i32, %c0_i32_0 : i32, i32
  }
  func.func @transform_3(%arg0: i32) -> (i32, i32) {
    %c0_i32 = arith.constant 0 : i32
    %c0_i32_0 = arith.constant 0 : i32
    %c0_i32_1 = arith.constant 0 : i32
    return %c0_i32, %c0_i32_0 : i32, i32
  }
  func.func @transform_4(%arg0: i32) -> (i32, i32, i32) {
    %c0_i32 = arith.constant 0 : i32
    %c0_i32_0 = arith.constant 0 : i32
    %c0_i32_1 = arith.constant 0 : i32
    %c0_i32_2 = arith.constant 0 : i32
    return %c0_i32, %c0_i32_0, %c0_i32_1 : i32, i32, i32
  }
  func.func @transform_5(%arg0: i32) -> (i32, i32, i32) {
    %c0_i32 = arith.constant 0 : i32
    %c0_i32_0 = arith.constant 0 : i32
    %c0_i32_1 = arith.constant 0 : i32
    %c0_i32_2 = arith.constant 0 : i32
    return %c0_i32, %c0_i32_0, %c0_i32_1 : i32, i32, i32
  }
  func.func @transform_6(%arg0: i32) -> (i32, i32) {
    %c0_i32 = arith.constant 0 : i32
    %c0_i32_0 = arith.constant 0 : i32
    %c0_i32_1 = arith.constant 0 : i32
    return %c0_i32, %c0_i32_0 : i32, i32
  }
  func.func @transform_7(%arg0: i32) -> (i32, i32) {
    %c0_i32 = arith.constant 0 : i32
    %c0_i32_0 = arith.constant 0 : i32
    %c0_i32_1 = arith.constant 0 : i32
    return %c0_i32, %c0_i32_0 : i32, i32
  }
}

</mosaic_0001>

<llo_original>
// kernel: tpu_custom_call.1
$region0: #{tpu_custom_call.1}
  #allocation0 [shape = 'u32[]', space=smem, size = 0x4, offset = 0x4, fixed_abs, tag = 'smem constant byte address 0x4 - core index']
  #allocation1 [shape = 'u32[144,128]{1,0:T(1,128)}', space=vmem, size = 0x12000, scoped, tag = 'internal scratch']
  #allocation2 [shape = 'f32[8,128]{1,0:T(8,128)}', space=vmem, size = 0x1000, scoped, tag = 'scratch operand']
  %s0 = inlined_call_operand.hbm [shape: f32[8,16], index: 0, kind: input, shape index: {}]
  %s1 = inlined_call_operand.hbm [shape: f32[16,128], index: 1, kind: input, shape index: {}]
  %s2 = inlined_call_operand.hbm [shape: f32[128,128], index: 2, kind: input, shape index: {}]
  %s3 = inlined_call_operand.vmem [shape: f32[8,128], index: 3, kind: input, shape index: {}]
  %s4 = inlined_call_operand.hbm [shape: f32[3,8,128], index: 4, kind: input, shape index: {}]
  %s5 = inlined_call_operand.hbm [shape: f32[1,8,128], index: 5, kind: output, shape index: {0}]
  %s6 = inlined_call_operand.hbm [shape: f32[8,128], index: 6, kind: output, shape index: {1}]
  %s7 = inlined_call_operand.hbm [shape: f32[8,128], index: 7, kind: output, shape index: {2}]
  %8 = xla_tuple %s5, %s6, %s7
  %s9 = sld [smem:[#allocation0]]
  $region62: #{tpu_custom_call.1} parent=0
    _
  %s11 = ssub.s32 1, %s9
  %s12 = scalar_select 0, %s11, %s9
  $region1: #{tpu_custom_call.1} parent=0
    #allocation3 [shape = 'u8[4096]{0}', space=vmem, size = 0x1000, scoped, tag = 'input window, operand 0, single buffered']
    #allocation4 [shape = 's32[1]{0}', space=sflag, size = 0x4, scoped, tag = 'scoped memory for tpu_custom_call.1']
    #allocation5 [shape = 's32[1]{0}', space=sflag, size = 0x4, scoped, tag = 'scoped memory for tpu_custom_call.1']
    #allocation6 [shape = 'u8[8192]{0}', space=vmem, size = 0x2000, scoped, tag = 'input window, operand 1, single buffered']
    #allocation7 [shape = 's32[1]{0}', space=sflag, size = 0x4, scoped, tag = 'scoped memory for tpu_custom_call.1']
    #allocation8 [shape = 'u8[65536]{0}', space=vmem, size = 0x10000, scoped, tag = 'input window, operand 2, single buffered']
    #allocation9 [shape = 'u8[12288]{0}', space=vmem, size = 0x3000, scoped, tag = 'input window, operand 4, single buffered']
    #allocation10 [shape = 's32[1]{0}', space=sflag, size = 0x4, scoped, tag = 'scoped memory for tpu_custom_call.1']
    #allocation11 [shape = 'u8[4096]{0}', space=vmem, size = 0x1000, scoped, tag = 'output window, operand 0, single buffered']
    #allocation12 [shape = 'u8[4096]{0}', space=vmem, size = 0x1000, scoped, tag = 'output window, operand 1, single buffered']
    #allocation13 [shape = 's32[1]{0}', space=sflag, size = 0x4, scoped, tag = 'scoped memory for tpu_custom_call.1']
    #allocation14 [shape = 'u8[4096]{0}', space=vmem, size = 0x1000, scoped, tag = 'output window, operand 2, single buffered']
    %13 = vsyncpa [#allocation4], 0
    %14 = vsyncpa [#allocation7], 0
    %15 = vsyncpa [#allocation10], 0
    %16 = vsyncpa [#allocation5], 0
    %17 = vsyncpa [#allocation13], 0
    // Predicated region
    $region2: #{tpu_custom_call.1} parent=1 // pred_check
      _
    $region3: #{tpu_custom_call.1} parent=1 // pred_check_branch
      %19 = sbr.rel (0) target = $region5
    $region4: #{tpu_custom_call.1} parent=1 // pred_region
      %s21 = ssub.s32 128, 128
      %22 = vsyncadd [#allocation4], %s21
      %s24 = sshll.u32 [#allocation3], 4
      %s25 = int_to_ptr.vmem [resolvable:$true] %s24
      %27 = dma.hbm_to_vmem [thread:$0]  %s0, 128, %s25, [#allocation4]
    $region5: #{tpu_custom_call.1} parent=1 // pred_fallthru
      _
    // Predicated region
    $region6: #{tpu_custom_call.1} parent=1 // pred_check
      _
    $region7: #{tpu_custom_call.1} parent=1 // pred_check_branch
      %29 = sbr.rel (0) target = $region9
    $region8: #{tpu_custom_call.1} parent=1 // pred_region
      %s31 = ssub.s32 256, 256
      %32 = vsyncadd [#allocation7], %s31
      %s33 = sshll.u32 [#allocation6], 4
      %s34 = int_to_ptr.vmem [resolvable:$true] %s33
      %39 = dma.hbm_to_vmem [thread:$0]  %s1, 256, %s34, [#allocation7], 128, 128, 8
    $region9: #{tpu_custom_call.1} parent=1 // pred_fallthru
      _
    // Predicated region
    $region10: #{tpu_custom_call.1} parent=1 // pred_check
      _
    $region11: #{tpu_custom_call.1} parent=1 // pred_check_branch
      %41 = sbr.rel (0) target = $region13
    $region12: #{tpu_custom_call.1} parent=1 // pred_region
      %s43 = ssub.s32 2048, 2048
      %44 = vsyncadd [#allocation7], %s43
      %s45 = sshll.u32 [#allocation8], 4
      %s46 = int_to_ptr.vmem [resolvable:$true] %s45
      %51 = dma.hbm_to_vmem [thread:$0]  %s2, 2048, %s46, [#allocation7], 128, 128, 8
    $region13: #{tpu_custom_call.1} parent=1 // pred_fallthru
      _
    // Predicated region
    $region14: #{tpu_custom_call.1} parent=1 // pred_check
      _
    $region15: #{tpu_custom_call.1} parent=1 // pred_check_branch
      %53 = sbr.rel (0) target = $region17
    $region16: #{tpu_custom_call.1} parent=1 // pred_region
      _
    $region17: #{tpu_custom_call.1} parent=1 // pred_fallthru
      _
    // Predicated region
    $region18: #{tpu_custom_call.1} parent=1 // pred_check
      _
    $region19: #{tpu_custom_call.1} parent=1 // pred_check_branch
      %55 = sbr.rel (0) target = $region21
    $region20: #{tpu_custom_call.1} parent=1 // pred_region
      %s57 = ssub.s32 384, 384
      %58 = vsyncadd [#allocation10], %s57
      %s59 = sshll.u32 [#allocation9], 4
      %s60 = int_to_ptr.vmem [resolvable:$true] %s59
      %65 = dma.hbm_to_vmem [thread:$0]  %s4, 384, %s60, [#allocation10], 128, 128, 8
    $region21: #{tpu_custom_call.1} parent=1 // pred_fallthru
      _
    // Predicated region
    $region22: #{tpu_custom_call.1} parent=1 // pred_check
      _
    $region23: #{tpu_custom_call.1} parent=1 // pred_check_branch
      %67 = sbr.rel (0) target = $region25
    $region24: #{tpu_custom_call.1} parent=1 // pred_region
      %68 = dma.done [#allocation4], 128
    $region25: #{tpu_custom_call.1} parent=1 // pred_fallthru
      _
    // Predicated region
    $region26: #{tpu_custom_call.1} parent=1 // pred_check
      _
    $region27: #{tpu_custom_call.1} parent=1 // pred_check_branch
      %70 = sbr.rel (0) target = $region29
    $region28: #{tpu_custom_call.1} parent=1 // pred_region
      %71 = dma.done [#allocation7], 256
    $region29: #{tpu_custom_call.1} parent=1 // pred_fallthru
      _
    // Predicated region
    $region30: #{tpu_custom_call.1} parent=1 // pred_check
      _
    $region31: #{tpu_custom_call.1} parent=1 // pred_check_branch
      %73 = sbr.rel (0) target = $region33
    $region32: #{tpu_custom_call.1} parent=1 // pred_region
      %74 = dma.done [#allocation7], 2048
    $region33: #{tpu_custom_call.1} parent=1 // pred_fallthru
      _
    // Predicated region
    $region34: #{tpu_custom_call.1} parent=1 // pred_check
      _
    $region35: #{tpu_custom_call.1} parent=1 // pred_check_branch
      %76 = sbr.rel (0) target = $region37
    $region36: #{tpu_custom_call.1} parent=1 // pred_region
      %77 = dma.done [#allocation10], 384
    $region37: #{tpu_custom_call.1} parent=1 // pred_fallthru
      _
    %v78 = vld [vmem:[%s3] sm:$0xff]
    %v79 = vld [vmem:[#allocation3] sm:$0xff]
    %v80 = vld [vmem:[#allocation6] sm:$0xff]
    %v81 = vld [vmem:[#allocation6 + $0x8] sm:$0xff]
    %v82 = vlaneseq
    %v83 = vshrl.u32 %v82, 7
    %v84 = vsub.s32 5, %v83
    %v85 = vrot.slane %v78, %v84
    %vm86 = vcmask 130048
    %v88 = vsel %vm86, %v79, 0
    %90 = vmatprep.subr.mxu0 0.0
    %91 = vmatpush1.msra.mxu0 %v80
    %92 = vmatprep.subr.mxu0 0.0
    %93 = vmatpush1.msra.mxu0 %v81
    %94 = vmatprep.subr.mxu0 0.0
    %95 = vmatpush1.msra.mxu0 0.0
    %96 = vmatprep.subr.mxu0 0.0
    %97 = vmatpush1.msra.mxu0 0.0
    %98 = vmatprep.subr.mxu0 0.0
    %99 = vmatpush1.msra.mxu0 0.0
    %100 = vmatprep.subr.mxu0 0.0
    %101 = vmatpush1.msra.mxu0 0.0
    %102 = vmatprep.subr.mxu0 0.0
    %103 = vmatpush1.msra.mxu0 0.0
    %104 = vmatprep.subr.mxu0 0.0
    %105 = vmatpush1.msra.mxu0 0.0
    %106 = vmatprep.subr.mxu0 0.0
    %107 = vmatpush1.msra.mxu0 0.0
    %108 = vmatprep.subr.mxu0 0.0
    %109 = vmatpush1.msra.mxu0 0.0
    %110 = vmatprep.subr.mxu0 0.0
    %111 = vmatpush1.msra.mxu0 0.0
    %112 = vmatprep.subr.mxu0 0.0
    %113 = vmatpush1.msra.mxu0 0.0
    %114 = vmatprep.subr.mxu0 0.0
    %115 = vmatpush1.msra.mxu0 0.0
    %116 = vmatprep.subr.mxu0 0.0
    %117 = vmatpush1.msra.mxu0 0.0
    %118 = vmatprep.subr.mxu0 0.0
    %119 = vmatpush1.msra.mxu0 0.0
    %120 = vmatprep.subr.mxu0 0.0
    %121 = vmatpush1.msra.mxu0 0.0
    %122 = vmatprep.subr.mxu0 0.0
    %123 = vmatpush1.msra.mxu0 0.0
    %124 = vmatprep.subr.mxu0 0.0
    %125 = vmatpush1.msra.mxu0 0.0
    %126 = vmatprep.subr.mxu0 0.0
    %127 = vmatpush1.msra.mxu0 0.0
    %128 = vmatprep.subr.mxu0 0.0
    %129 = vmatpush1.msra.mxu0 0.0
    %130 = vmatprep.subr.mxu0 0.0
    %131 = vmatpush1.msra.mxu0 0.0
    %132 = vmatprep.subr.mxu0 0.0
    %133 = vmatpush1.msra.mxu0 0.0
    %134 = vmatprep.subr.mxu0 0.0
    %135 = vmatpush1.msra.mxu0 0.0
    %136 = vmatprep.subr.mxu0 0.0
    %137 = vmatpush1.msra.mxu0 0.0
    %138 = vmatprep.subr.mxu0 0.0
    %139 = vmatpush1.msra.mxu0 0.0
    %140 = vmatprep.subr.mxu0 0.0
    %141 = vmatpush1.msra.mxu0 0.0
    %142 = vmatprep.subr.mxu0 0.0
    %143 = vmatpush1.msra.mxu0 0.0
    %144 = vmatprep.subr.mxu0 0.0
    %145 = vmatpush1.msra.mxu0 0.0
    %146 = vmatprep.subr.mxu0 0.0
    %147 = vmatpush1.msra.mxu0 0.0
    %148 = vmatprep.subr.mxu0 0.0
    %149 = vmatpush1.msra.mxu0 0.0
    %150 = vmatprep.subr.mxu0 0.0
    %151 = vmatpush1.msra.mxu0 0.0
    %152 = vmatprep.subr.mxu0 0.0
    %153 = vmatpush1.msra.mxu0 0.0
    %154 = vmatprep.mubr.f32.mxu0 0.0
    %155 = vmatmul.mubr.f32.gmra.mrb[0].mxu0 %v88
    %v156 = vpop.f32.mrb[0].mxu0
    %v157 = vadd.f32 %v85, %v156
    %v158 = vpop.f32.mrb[0].mxu0
    %159 = vdwg.mxu0
    %160 = vst [vmem:[#allocation2] sm:$0xff] %v157
    %v161 = vlaneseq
    %v162 = vshrl.u32 %v161, 7
    %v163 = vsub.s32 0, %v162
    %v164 = vrot.slane %v78, %v163
    %v165 = vlaneseq
    %v166 = vshrl.u32 %v165, 7
    %v167 = vsub.s32 1, %v166
    %v168 = vrot.slane %v78, %v167
    %v169 = vlaneseq
    %v170 = vshrl.u32 %v169, 7
    %v171 = vsub.s32 2, %v170
    %v172 = vrot.slane %v78, %v171
    %v173 = vlaneseq
    %v174 = vshrl.u32 %v173, 7
    %v175 = vsub.s32 3, %v174
    %v176 = vrot.slane %v78, %v175
    %v177 = vlaneseq
    %v178 = vshrl.u32 %v177, 7
    %v179 = vsub.s32 4, %v178
    %v180 = vrot.slane %v78, %v179
    %v181 = vld [vmem:[#allocation8] sm:$0xff]
    %v182 = vld [vmem:[#allocation8 + $0x8] sm:$0xff]
    %v183 = vld [vmem:[#allocation8 + $0x10] sm:$0xff]
    %v184 = vld [vmem:[#allocation8 + $0x18] sm:$0xff]
    %v185 = vld [vmem:[#allocation8 + $0x20] sm:$0xff]
    %v186 = vld [vmem:[#allocation8 + $0x28] sm:$0xff]
    %v187 = vld [vmem:[#allocation8 + $0x30] sm:$0xff]
    %v188 = vld [vmem:[#allocation8 + $0x38] sm:$0xff]
    %v189 = vld [vmem:[#allocation8 + $0x40] sm:$0xff]
    %v190 = vld [vmem:[#allocation8 + $0x48] sm:$0xff]
    %v191 = vld [vmem:[#allocation8 + $0x50] sm:$0xff]
    %v192 = vld [vmem:[#allocation8 + $0x58] sm:$0xff]
    %v193 = vld [vmem:[#allocation8 + $0x60] sm:$0xff]
    %v194 = vld [vmem:[#allocation8 + $0x68] sm:$0xff]
    %v195 = vld [vmem:[#allocation8 + $0x70] sm:$0xff]
    %v196 = vld [vmem:[#allocation8 + $0x78] sm:$0xff]
    %v197 = vld [vmem:[#allocation9] sm:$0xff]
    %s198 = scalar_lea.vmem [#allocation9], 8
    %v199 = vld [vmem:[%s198] sm:$0xff]
    %s200 = scalar_lea.vmem [#allocation9], 16
    %v201 = vld [vmem:[%s200] sm:$0xff]
    %v202 = vsub.f32 1.0, %v199
    %v203 = vmul.f32 %v164, %v202
    %v204 = vadd.f32 %v199, %v203
    %v205 = vmul.f32 %v168, %v201
    %v206 = vmul.f32 %v205, %v199
    %v207 = vmul.f32 %v206, %v197
    %v208 = vsub.f32 %v204, %v207
    %v209 = vmax.f32 %v208, 0.0
    %v210 = vmin.f32 %v209, 1.0
    %v211 = vadd.f32 %v201, %v172
    %v212 = vmul.f32 %v176, %v201
    %v213 = vsub.f32 %v211, %v212
    %v214 = vsub.f32 1.0, %v201
    %v215 = vmul.f32 %v180, %v214
    %v216 = vmul.f32 %v215, %v197
    %v217 = vadd.f32 %v213, %v216
    %v218 = vmax.f32 %v217, 0.0
    %v219 = vmin.f32 %v218, 1.0
    %v220 = vmul.f32 %v219, %v210
    %v221 = vmul.f32 %v220, %v197
    %v222 = vld [vmem:[#allocation2] sm:$0xff]
    %223 = vmatprep.subr.mxu0 0.0
    %224 = vmatpush1.msra.mxu0 %v181
    %225 = vmatprep.subr.mxu0 0.0
    %226 = vmatpush1.msra.mxu0 %v182
    %227 = vmatprep.subr.mxu0 0.0
    %228 = vmatpush1.msra.mxu0 %v183
    %229 = vmatprep.subr.mxu0 0.0
    %230 = vmatpush1.msra.mxu0 %v184
    %231 = vmatprep.subr.mxu0 0.0
    %232 = vmatpush1.msra.mxu0 %v185
    %233 = vmatprep.subr.mxu0 0.0
    %234 = vmatpush1.msra.mxu0 %v186
    %235 = vmatprep.subr.mxu0 0.0
    %236 = vmatpush1.msra.mxu0 %v187
    %237 = vmatprep.subr.mxu0 0.0
    %238 = vmatpush1.msra.mxu0 %v188
    %239 = vmatprep.subr.mxu0 0.0
    %240 = vmatpush1.msra.mxu0 %v189
    %241 = vmatprep.subr.mxu0 0.0
    %242 = vmatpush1.msra.mxu0 %v190
    %243 = vmatprep.subr.mxu0 0.0
    %244 = vmatpush1.msra.mxu0 %v191
    %245 = vmatprep.subr.mxu0 0.0
    %246 = vmatpush1.msra.mxu0 %v192
    %247 = vmatprep.subr.mxu0 0.0
    %248 = vmatpush1.msra.mxu0 %v193
    %249 = vmatprep.subr.mxu0 0.0
    %250 = vmatpush1.msra.mxu0 %v194
    %251 = vmatprep.subr.mxu0 0.0
    %252 = vmatpush1.msra.mxu0 %v195
    %253 = vmatprep.subr.mxu0 0.0
    %254 = vmatpush1.msra.mxu0 %v196
    %255 = vmatprep.subr.mxu0 0.0
    %256 = vmatpush1.msra.mxu0 0.0
    %257 = vmatprep.subr.mxu0 0.0
    %258 = vmatpush1.msra.mxu0 0.0
    %259 = vmatprep.subr.mxu0 0.0
    %260 = vmatpush1.msra.mxu0 0.0
    %261 = vmatprep.subr.mxu0 0.0
    %262 = vmatpush1.msra.mxu0 0.0
    %263 = vmatprep.subr.mxu0 0.0
    %264 = vmatpush1.msra.mxu0 0.0
    %265 = vmatprep.subr.mxu0 0.0
    %266 = vmatpush1.msra.mxu0 0.0
    %267 = vmatprep.subr.mxu0 0.0
    %268 = vmatpush1.msra.mxu0 0.0
    %269 = vmatprep.subr.mxu0 0.0
    %270 = vmatpush1.msra.mxu0 0.0
    %271 = vmatprep.subr.mxu0 0.0
    %272 = vmatpush1.msra.mxu0 0.0
    %273 = vmatprep.subr.mxu0 0.0
    %274 = vmatpush1.msra.mxu0 0.0
    %275 = vmatprep.subr.mxu0 0.0
    %276 = vmatpush1.msra.mxu0 0.0
    %277 = vmatprep.subr.mxu0 0.0
    %278 = vmatpush1.msra.mxu0 0.0
    %279 = vmatprep.subr.mxu0 0.0
    %280 = vmatpush1.msra.mxu0 0.0
    %281 = vmatprep.subr.mxu0 0.0
    %282 = vmatpush1.msra.mxu0 0.0
    %283 = vmatprep.subr.mxu0 0.0
    %284 = vmatpush1.msra.mxu0 0.0
    %285 = vmatprep.subr.mxu0 0.0
    %286 = vmatpush1.msra.mxu0 0.0
    %287 = vmatprep.mubr.f32.mxu0 0.0
    %288 = vmatmul.mubr.f32.gmra.mrb[0].mxu0 %v221
    %v289 = vpop.f32.mrb[0].mxu0
    %v290 = vadd.f32 0.0, %v289
    %v291 = vpop.f32.mrb[0].mxu0
    %292 = vdwg.mxu0
    %v293 = vadd.f32 %v222, %v290
    %v294 = vmul.f32 %v197, 0.9
    %v295 = vmax.f32 %v293, 0.0
    %v296 = vmul.f32 %v295, 0.1
    %v297 = vadd.f32 %v294, %v296
    %298 = vst [vmem:[#allocation11] sm:$0xff] %v297
    %299 = vst [vmem:[#allocation12] sm:$0xff] %v210
    %300 = vst [vmem:[#allocation14] sm:$0xff] %v219
    // Predicated region
    $region38: #{tpu_custom_call.1} parent=1 // pred_check
      _
    $region39: #{tpu_custom_call.1} parent=1 // pred_check_branch
      %302 = sbr.rel (0) target = $region41
    $region40: #{tpu_custom_call.1} parent=1 // pred_region
      %s304 = ssub.s32 128, 128
      %305 = vsyncadd [#allocation5], %s304
      %s307 = sshll.u32 [#allocation11], 4
      %s308 = int_to_ptr.vmem [resolvable:$true] %s307
      %310 = dma.vmem_to_hbm [thread:$0]  %s308, 128, %s5, [#allocation5]
    $region41: #{tpu_custom_call.1} parent=1 // pred_fallthru
      _
    // Predicated region
    $region42: #{tpu_custom_call.1} parent=1 // pred_check
      _
    $region43: #{tpu_custom_call.1} parent=1 // pred_check_branch
      %312 = sbr.rel (0) target = $region45
    $region44: #{tpu_custom_call.1} parent=1 // pred_region
      %s314 = ssub.s32 128, 128
      %315 = vsyncadd [#allocation13], %s314
      %s317 = sshll.u32 [#allocation12], 4
      %s318 = int_to_ptr.vmem [resolvable:$true] %s317
      %320 = dma.vmem_to_hbm [thread:$0]  %s318, 128, %s6, [#allocation13]
    $region45: #{tpu_custom_call.1} parent=1 // pred_fallthru
      _
    // Predicated region
    $region46: #{tpu_custom_call.1} parent=1 // pred_check
      _
    $region47: #{tpu_custom_call.1} parent=1 // pred_check_branch
      %322 = sbr.rel (0) target = $region49
    $region48: #{tpu_custom_call.1} parent=1 // pred_region
      %s324 = ssub.s32 128, 128
      %325 = vsyncadd [#allocation13], %s324
      %s327 = sshll.u32 [#allocation14], 4
      %s328 = int_to_ptr.vmem [resolvable:$true] %s327
      %330 = dma.vmem_to_hbm [thread:$0]  %s328, 128, %s7, [#allocation13]
    $region49: #{tpu_custom_call.1} parent=1 // pred_fallthru
      _
    // Predicated region
    $region50: #{tpu_custom_call.1} parent=1 // pred_check
      _
    $region51: #{tpu_custom_call.1} parent=1 // pred_check_branch
      %332 = sbr.rel (0) target = $region53
    $region52: #{tpu_custom_call.1} parent=1 // pred_region
      %333 = dma.done [#allocation5], 128
    $region53: #{tpu_custom_call.1} parent=1 // pred_fallthru
      _
    // Predicated region
    $region54: #{tpu_custom_call.1} parent=1 // pred_check
      _
    $region55: #{tpu_custom_call.1} parent=1 // pred_check_branch
      %335 = sbr.rel (0) target = $region57
    $region56: #{tpu_custom_call.1} parent=1 // pred_region
      %336 = dma.done [#allocation13], 128
    $region57: #{tpu_custom_call.1} parent=1 // pred_fallthru
      _
    // Predicated region
    $region58: #{tpu_custom_call.1} parent=1 // pred_check
      _
    $region59: #{tpu_custom_call.1} parent=1 // pred_check_branch
      %338 = sbr.rel (0) target = $region61
    $region60: #{tpu_custom_call.1} parent=1 // pred_region
      %339 = dma.done [#allocation13], 128
    $region61: #{tpu_custom_call.1} parent=1 // pred_fallthru
      _
    %340 = vsyncpa [#allocation4], 1
    %341 = vsyncpa [#allocation7], 1
    %342 = vsyncpa [#allocation10], 1
    %343 = vsyncpa [#allocation5], 1
    %344 = vsyncpa [#allocation13], 1

</llo_original>
